<compile_context>
chip_gen: v5e
topology: v5e:2x2
jax: 0.10.0
libtpu: 0.0.40
codegen_flags: <defaults>
</compile_context>

<pallas_src>
import functools

import jax
import jax.numpy as jnp
from jax.experimental import pallas as pl
from jax.experimental.pallas import tpu as pltpu


_VMEM_BUDGET = 40 * 1024 * 1024      # conservative: fits v7x's 64 MiB VMEM
_PAD_BIAS = -1e30                    # padded-class bias -> vanishes in softmax


def _round_up(x: int, m: int) -> int:
    return ((x + m - 1) // m) * m


def _cdiv(a: int, b: int) -> int:
    return (a + b - 1) // b


# ----------------------------------------------------------------------------
# Kernels
# ----------------------------------------------------------------------------
def _cls_kernel_resident(x_ref, w_ref, b_ref, o_ref):
    """Whole (padded) W resident in VMEM; one M tile per grid step."""
    logits = jnp.dot(x_ref[...], w_ref[...], preferred_element_type=jnp.float32)
    logits = logits + b_ref[...]                       # (tm, N_pad) f32
    m = jnp.max(logits, axis=-1, keepdims=True)
    shifted = logits - m
    lse = jnp.log(jnp.sum(jnp.exp(shifted), axis=-1, keepdims=True))
    o_ref[...] = (shifted - lse).astype(o_ref.dtype)


def _cls_kernel_ktiled(x_ref, w_ref, b_ref, o_ref, acc_ref):
    """K-reduction grid with f32 VMEM accumulator; log-softmax epilogue."""
    k = pl.program_id(1)

    @pl.when(k == 0)
    def _():
        acc_ref[...] = jnp.zeros_like(acc_ref)

    acc_ref[...] += jnp.dot(
        x_ref[...], w_ref[...], preferred_element_type=jnp.float32
    )

    @pl.when(k == pl.num_programs(1) - 1)
    def _():
        logits = acc_ref[...] + b_ref[...]
        m = jnp.max(logits, axis=-1, keepdims=True)
        shifted = logits - m
        lse = jnp.log(jnp.sum(jnp.exp(shifted), axis=-1, keepdims=True))
        o_ref[...] = (shifted - lse).astype(o_ref.dtype)


# ----------------------------------------------------------------------------
# Tile selection (minimize padding instead of rounding up to a fixed tile)
# ----------------------------------------------------------------------------
def _choose_m_tiling(M: int, tm_target: int, unit: int):
    Mu = _round_up(max(M, 1), unit)
    n = max(1, _cdiv(Mu, tm_target))
    if n == 1 and Mu >= 128:
        n = 2  # >=2 M tiles so the "parallel" axis can use both v7x TensorCores
    tm = _round_up(_cdiv(Mu, n), unit)
    return tm, tm * n, n


def _choose_k_tiling(K: int, tk_target: int):
    # tk must be a multiple of 128; prefer a split that exactly covers
    # round_up(K, 128) so x needs no extra K padding.
    K128 = _round_up(K, 128)
    n0 = max(1, _cdiv(K128, tk_target))
    best = None
    for n in range(n0, n0 + 4):
        tk = _round_up(_cdiv(K128, n), 128)
        pad = n * tk - K128
        if best is None or pad < best[2]:
            best = (tk, n, pad)
        if pad == 0:
            break
    tk, n, _ = best
    return tk, tk * n, n


# ----------------------------------------------------------------------------
# Wrapper
# ----------------------------------------------------------------------------
@functools.partial(jax.jit, static_argnames=("tm_target", "tk_target"))
def cls_classifier_forward(x, weight, bias, *, tm_target=512, tk_target=512):
    """log_softmax(x @ weight + bias, axis=-1).

    x:      (..., hidden)
    weight: (hidden, num_class)   # == torch nn.Linear.weight.T
    bias:   (num_class,)
    """
    orig_shape = x.shape
    K = orig_shape[-1]
    N = weight.shape[-1]

    compute_dtype = x.dtype
    if weight.dtype != compute_dtype:
        weight = weight.astype(compute_dtype)   # avoid silent f32 promotion
    out_dtype = compute_dtype

    x2 = x.reshape(-1, K)
    M = x2.shape[0]

    isz = jnp.dtype(compute_dtype).itemsize
    out_isz = jnp.dtype(out_dtype).itemsize
    m_unit = max(8, 32 // isz)                   # native sublane tile (bf16->16)

    N_pad = _round_up(N, 128)                    # lane-dense output columns
    tm, M_pad, n_m = _choose_m_tiling(M, tm_target, m_unit)

    # Padded weight / bias (tiny: only the classifier head)
    w_p = weight if N_pad == N else jnp.pad(weight, ((0, 0), (0, N_pad - N)))
    b_p = jnp.pad(
        bias.astype(jnp.float32), ((0, N_pad - N),), constant_values=_PAD_BIAS
    ).reshape(1, N_pad)

    # Working set if the whole W stays resident (double-buffered x/out tiles).
    resident_bytes = (
        2 * tm * K * isz            # x tile
        + 2 * K * N_pad * isz       # W slab (fetched once)
        + 2 * tm * N_pad * out_isz  # output tile
    )

    if resident_bytes <= _VMEM_BUDGET:
        # ---------------- W-resident path: no K grid axis, no K padding -----
        x_p = x2 if M_pad == M else jnp.pad(x2, ((0, M_pad - M), (0, 0)))

        vmem_limit = int(min(64 << 20, max(resident_bytes + (4 << 20), 16 << 20)))
        cost = pl.CostEstimate(
            flops=2 * M_pad * K * N_pad,
            transcendentals=M_pad * N_pad,
            bytes_accessed=(M_pad * K * isz + K * N_pad * isz
                            + M_pad * N_pad * out_isz),
        )

        out = pl.pallas_call(
            _cls_kernel_resident,
            out_shape=jax.ShapeDtypeStruct((M_pad, N_pad), out_dtype),
            grid=(n_m,),
            in_specs=[
                pl.BlockSpec((tm, K), lambda i: (i, 0)),       # x tile
                pl.BlockSpec((K, N_pad), lambda i: (0, 0)),    # resident W
                pl.BlockSpec((1, N_pad), lambda i: (0, 0)),    # bias row
            ],
            out_specs=pl.BlockSpec((tm, N_pad), lambda i: (i, 0)),
            compiler_params=pltpu.CompilerParams(
                dimension_semantics=("parallel",),
                vmem_limit_bytes=vmem_limit,
            ),
            cost_estimate=cost,
        )(x_p, w_p, b_p)
    else:
        # ---------------- K-tiled fallback (large hidden sizes) -------------
        # TODO(synk): vocab-scale num_class would additionally need an N grid
        # axis with an online log-softmax; classifier heads never hit this.

        # Keep the f32 accumulator + out tile inside the budget.
        while tm > m_unit and (3 * tm * N_pad * 4) > _VMEM_BUDGET // 2:
            tm = max(m_unit, _round_up(tm // 2, m_unit))
        n_m = _cdiv(_round_up(M, m_unit), tm)
        M_pad = n_m * tm

        tk, K_pad, n_k = _choose_k_tiling(K, tk_target)

        def _ws(tk_):
            return (2 * tm * tk_ * isz + 2 * tk_ * N_pad * isz
                    + 2 * tm * N_pad * out_isz + tm * N_pad * 4)

        while tk > 128 and _ws(tk) > _VMEM_BUDGET:
            tk = _round_up(tk // 2, 128)
        K_pad = _round_up(_round_up(K, 128), tk)
        n_k = K_pad // tk

        x_p = jnp.pad(x2, ((0, M_pad - M), (0, K_pad - K)))
        w_kp = jnp.pad(w_p, ((0, K_pad - K), (0, 0)))

        vmem_limit = int(min(64 << 20, max(_ws(tk) + (4 << 20), 16 << 20)))
        cost = pl.CostEstimate(
            flops=2 * M_pad * K_pad * N_pad,
            transcendentals=M_pad * N_pad,
            bytes_accessed=(M_pad * K_pad * isz + n_m * K_pad * N_pad * isz
                            + M_pad * N_pad * out_isz),
        )

        out = pl.pallas_call(
            _cls_kernel_ktiled,
            out_shape=jax.ShapeDtypeStruct((M_pad, N_pad), out_dtype),
            grid=(n_m, n_k),
            in_specs=[
                pl.BlockSpec((tm, tk), lambda i, k: (i, k)),     # x tile
                pl.BlockSpec((tk, N_pad), lambda i, k: (k, 0)),  # W slab
                pl.BlockSpec((1, N_pad), lambda i, k: (0, 0)),   # bias row
            ],
            out_specs=pl.BlockSpec((tm, N_pad), lambda i, k: (i, 0)),
            scratch_shapes=[pltpu.VMEM((tm, N_pad), jnp.float32)],
            compiler_params=pltpu.CompilerParams(
                dimension_semantics=("parallel", "arbitrary"),
                vmem_limit_bytes=vmem_limit,
            ),
            cost_estimate=cost,
        )(x_p, w_kp, b_p)

    return out[:M, :N].reshape(*orig_shape[:-1], N)


# ----------------------------------------------------------------------------
if __name__ == "__main__":
    batch, hidden, num_class = 8, 32, 3

    key = jax.random.PRNGKey(0)
    kx, kw, kb = jax.random.split(key, 3)
    x = jax.random.normal(kx, (batch, hidden), jnp.float32)
    # weight stored as (hidden, num_class) == torch nn.Linear.weight.T
    weight = 0.05 * jax.random.normal(kw, (hidden, num_class), jnp.float32)
    bias = 0.01 * jax.random.normal(kb, (num_class,), jnp.float32)

    out = cls_classifier_forward(x, weight, bias)
    out = jax.block_until_ready(out)

    # reference (plain JAX) check of forward semantics
    ref = jax.nn.log_softmax(x @ weight + bias, axis=-1)
    assert out.shape == (batch, num_class)
    assert bool(jnp.all(jnp.isfinite(out)))
    assert bool(jnp.allclose(out, ref, atol=1e-5, rtol=1e-5))
    # log-softmax rows must exp-sum to 1
    assert bool(jnp.allclose(jnp.sum(jnp.exp(out), axis=-1), 1.0, atol=1e-5))

    # also exercise a leading-dims input (e.g. (batch, seq, hidden))
    x3 = jax.random.normal(kx, (2, 4, hidden), jnp.float32)
    out3 = jax.block_until_ready(cls_classifier_forward(x3, weight, bias))
    ref3 = jax.nn.log_softmax(x3 @ weight + bias, axis=-1)
    assert out3.shape == (2, 4, num_class)
    assert bool(jnp.allclose(out3, ref3, atol=1e-5, rtol=1e-5))

    print("KERNEL_OK")
</pallas_src>

<mosaic_0001>
module attributes {stable_mosaic.version = 11 : i64} {
  func.func @_cls_kernel_resident(%arg0: i32, %arg1: memref<8x32xf32, #tpu.memory_space<vmem>>, %arg2: memref<32x128xf32, #tpu.memory_space<vmem>>, %arg3: memref<1x128xf32, #tpu.memory_space<vmem>>, %arg4: memref<8x128xf32, #tpu.memory_space<vmem>>) attributes {dimension_semantics = [#tpu.dimension_semantics<parallel>], iteration_bounds = array<i64: 1>, scalar_prefetch = 0 : i64, scratch_operands = 0 : i64, tpu.core_type = #tpu.core_type<tc>, window_params = [{transform_indices = @transform_0, window_bounds = array<i64: 8, 32>}, {pipeline_mode = #tpu.pipeline_mode<synchronous>, transform_indices = @transform_1, window_bounds = array<i64: 32, 128>}, {pipeline_mode = #tpu.pipeline_mode<synchronous>, transform_indices = @transform_2, window_bounds = array<i64: 1, 128>}, {transform_indices = @transform_3, window_bounds = array<i64: 8, 128>}]} {
    %c0 = arith.constant 0 : index
    %c0_0 = arith.constant 0 : index
    %0 = vector.load %arg1[%c0, %c0_0] : memref<8x32xf32, #tpu.memory_space<vmem>>, vector<8x32xf32>
    %c0_1 = arith.constant 0 : index
    %c0_2 = arith.constant 0 : index
    %1 = vector.load %arg2[%c0_1, %c0_2] : memref<32x128xf32, #tpu.memory_space<vmem>>, vector<32x128xf32>
    %cst = arith.constant dense<0.000000e+00> : vector<8x128xf32>
    %2 = tpu.matmul %0, %1, %cst {dimension_numbers = #tpu.dot_dimension_numbers<[1], [0], [0], [1], [0, 0, 1, 1], [], []>} : vector<8x32xf32>, vector<32x128xf32>, vector<8x128xf32> -> vector<8x128xf32>
    %c0_3 = arith.constant 0 : index
    %c0_4 = arith.constant 0 : index
    %3 = vector.load %arg3[%c0_3, %c0_4] : memref<1x128xf32, #tpu.memory_space<vmem>>, vector<1x128xf32>
    %4 = vector.broadcast %3 : vector<1x128xf32> to vector<8x128xf32>
    %5 = arith.addf %2, %4 : vector<8x128xf32>
    %cst_5 = arith.constant dense<0xFF800000> : vector<8xf32>
    %6 = vector.multi_reduction <maximumf>, %5, %cst_5 [1] : vector<8x128xf32> to vector<8xf32>
    %7 = vector.shape_cast %6 : vector<8xf32> to vector<8x1xf32>
    %8 = vector.broadcast %7 : vector<8x1xf32> to vector<8x128xf32>
    %9 = arith.subf %5, %8 : vector<8x128xf32>
    %10 = math.exp %9 : vector<8x128xf32>
    %cst_6 = arith.constant dense<0.000000e+00> : vector<8xf32>
    %11 = vector.multi_reduction <add>, %10, %cst_6 [1] : vector<8x128xf32> to vector<8xf32>
    %12 = vector.shape_cast %11 : vector<8xf32> to vector<8x1xf32>
    %13 = math.log %12 : vector<8x1xf32>
    %14 = vector.broadcast %13 : vector<8x1xf32> to vector<8x128xf32>
    %15 = arith.subf %9, %14 : vector<8x128xf32>
    %c0_7 = arith.constant 0 : index
    %c0_8 = arith.constant 0 : index
    %16 = vector.load %arg4[%c0_7, %c0_8] : memref<8x128xf32, #tpu.memory_space<vmem>>, vector<8x128xf32>
    tpu.vector_store %arg4[%c0_7, %c0_8], %15 {strides = array<i32>} : memref<8x128xf32, #tpu.memory_space<vmem>>, vector<8x128xf32>,
    return
  }
  func.func @transform_0(%arg0: i32) -> (i32, i32) {
    %c0_i32 = arith.constant 0 : i32
    %c0_i32_0 = arith.constant 0 : i32
    return %arg0, %c0_i32 : i32, i32
  }
  func.func @transform_1(%arg0: i32) -> (i32, i32) {
    %c0_i32 = arith.constant 0 : i32
    %c0_i32_0 = arith.constant 0 : i32
    %c0_i32_1 = arith.constant 0 : i32
    return %c0_i32, %c0_i32_0 : i32, i32
  }
  func.func @transform_2(%arg0: i32) -> (i32, i32) {
    %c0_i32 = arith.constant 0 : i32
    %c0_i32_0 = arith.constant 0 : i32
    %c0_i32_1 = arith.constant 0 : i32
    return %c0_i32, %c0_i32_0 : i32, i32
  }
  func.func @transform_3(%arg0: i32) -> (i32, i32) {
    %c0_i32 = arith.constant 0 : i32
    %c0_i32_0 = arith.constant 0 : i32
    return %arg0, %c0_i32 : i32, i32
  }
}

</mosaic_0001>

<llo_original>
// kernel: cls_classifier_forward.1
$region0: #{cls_classifier_forward.1}
  #allocation0 [shape = 'u32[]', space=smem, size = 0x4, offset = 0x4, fixed_abs, tag = 'smem constant byte address 0x4 - core index']
  #allocation1 [shape = 'u32[72,128]{1,0:T(1,128)}', space=vmem, size = 0x9000, scoped, tag = 'internal scratch']
  %s0 = inlined_call_operand.vmem [shape: f32[8,32], index: 0, kind: input, shape index: {}]
  %s1 = inlined_call_operand.vmem [shape: f32[32,128], index: 1, kind: input, shape index: {}]
  %s2 = inlined_call_operand.vmem [shape: f32[1,128], index: 2, kind: input, shape index: {}]
  %s3 = inlined_call_operand.vmem [shape: f32[8,128], index: 3, kind: output, shape index: {}]
  %s4 = sld [smem:[#allocation0]]
  $region22: #{cls_classifier_forward.1} parent=0
    _
  %s6 = ssub.s32 1, %s4
  %s7 = scalar_select 0, %s6, %s4
  // Predicated region
  $region2: #{cls_classifier_forward.1} parent=0 // pred_check
    _
  $region3: #{cls_classifier_forward.1} parent=0 // pred_check_branch
    %9 = sbr.rel (0) target = $region5
  $region4: #{cls_classifier_forward.1} parent=0 // pred_region
    _
  $region5: #{cls_classifier_forward.1} parent=0 // pred_fallthru
    _
  // Predicated region
  $region6: #{cls_classifier_forward.1} parent=0 // pred_check
    _
  $region7: #{cls_classifier_forward.1} parent=0 // pred_check_branch
    %11 = sbr.rel (0) target = $region9
  $region8: #{cls_classifier_forward.1} parent=0 // pred_region
    _
  $region9: #{cls_classifier_forward.1} parent=0 // pred_fallthru
    _
  // Predicated region
  $region10: #{cls_classifier_forward.1} parent=0 // pred_check
    _
  $region11: #{cls_classifier_forward.1} parent=0 // pred_check_branch
    %13 = sbr.rel (0) target = $region13
  $region12: #{cls_classifier_forward.1} parent=0 // pred_region
    _
  $region13: #{cls_classifier_forward.1} parent=0 // pred_fallthru
    _
  %v14 = vld [vmem:[%s0] sm:$0xff]
  %v15 = vld [vmem:[%s1] sm:$0xff]
  %v16 = vld [vmem:[%s1 + $0x8] sm:$0xff]
  %v17 = vld [vmem:[%s1 + $0x10] sm:$0xff]
  %v18 = vld [vmem:[%s1 + $0x18] sm:$0xff]
  %v19 = vld [vmem:[%s2] sm:$0x1]
  %v21 = vperm.slane %v19, 0
  %vm23 = vcmask 261120
  %v25 = vsel %vm23, %v14, 0
  %27 = vmatpush.msra.mxu0 0.0
  %28 = vmatpush.msra.mxu0 0.0
  %29 = vmatpush.msra.mxu0 0.0
  %30 = vmatpush.msra.mxu0 0.0
  %31 = vmatpush.msra.mxu0 0.0
  %32 = vmatpush.msra.mxu0 0.0
  %33 = vmatpush.msra.mxu0 0.0
  %34 = vmatpush.msra.mxu0 0.0
  %35 = vmatpush.msra.mxu0 0.0
  %36 = vmatpush.msra.mxu0 0.0
  %37 = vmatpush.msra.mxu0 0.0
  %38 = vmatpush.msra.mxu0 0.0
  %39 = vmatpush.msra.mxu0 %v18
  %40 = vmatpush.msra.mxu0 %v17
  %41 = vmatpush.msra.mxu0 %v16
  %42 = vmatpush.msra.mxu0 %v15
  %43 = vmatmul.f32.gmra.mxu0 %v25
  %v44 = vpop.f32.mrf.mxu0
  %v45 = vadd.f32 %v21, %v44
  %46 = vdwg.mxu0
  %47 = vmax.xlane.f32.xlu0 %v45
  %v48 = vpop.xlane.xlu0 %47
  %v49 = vsub.f32 %v45, %v48
  %v50 = vmul.f32 %v49, 1.442695
  %v51 = vpow.pop %v50
  %52 = vadd.xlane.f32.xlu0 %v51
  %v53 = vpop.xlane.xlu0 %52
  %v54 = vlog2.pop %v53
  %v55 = vmul.f32 %v54, 0.6931472
  %v56 = vsub.f32 %v49, %v55
  %57 = vst [vmem:[%s3] sm:$0xff] %v56
  // Predicated region
  $region14: #{cls_classifier_forward.1} parent=0 // pred_check
    _
  $region15: #{cls_classifier_forward.1} parent=0 // pred_check_branch
    %59 = sbr.rel (0) target = $region17
  $region16: #{cls_classifier_forward.1} parent=0 // pred_region
    _
  $region17: #{cls_classifier_forward.1} parent=0 // pred_fallthru
    _
  // Predicated region
  $region18: #{cls_classifier_forward.1} parent=0 // pred_check
    _
  $region19: #{cls_classifier_forward.1} parent=0 // pred_check_branch
    %61 = sbr.rel (0) target = $region21
  $region20: #{cls_classifier_forward.1} parent=0 // pred_region
    _
  $region21: #{cls_classifier_forward.1} parent=0 // pred_fallthru
    _

</llo_original>
